<compile_context>
chip_gen: v6e
topology: v6e:2x2x1
jax: 0.10.0
libtpu: 0.0.40
codegen_flags: <defaults>
</compile_context>

<pallas_src>
import jax
import jax.numpy as jnp
from jax.experimental import pallas as pl
from jax.experimental.pallas import tpu as pltpu


def _policy_kernel(obs_ref, w1_ref, b1_ref, w2_ref, b2_ref, w3_ref, b3_ref,
                   out_ref):
    # obs_ref: (tile_b, S); w*: full weight matrices (resident); b*: (1, dim)
    x = obs_ref[...]                                     # feeds MXU natively (f32 or bf16)
    h = jnp.dot(x, w1_ref[...], preferred_element_type=jnp.float32) + b1_ref[...]
    h = jnp.maximum(h, 0.0)                              # ReLU (f32 on the VPU)
    h = jnp.dot(h.astype(w2_ref.dtype), w2_ref[...],
                preferred_element_type=jnp.float32) + b2_ref[...]
    h = jnp.maximum(h, 0.0)                              # ReLU
    y = jnp.dot(h.astype(w3_ref.dtype), w3_ref[...],
                preferred_element_type=jnp.float32) + b3_ref[...]
    out_ref[...] = jnp.tanh(y).astype(out_ref.dtype)     # Tanh head


def _jnp_forward(obs, w1, b1, w2, b2, w3, b3):
    h = jnp.maximum(jnp.dot(obs, w1) + b1, 0.0)
    h = jnp.maximum(jnp.dot(h, w2) + b2, 0.0)
    return jnp.tanh(jnp.dot(h, w3) + b3)


def _round_up(x, m):
    return ((x + m - 1) // m) * m


def deterministic_policy_forward(obs, params, *, block_b: int = 512,
                                 small_batch_fallback: int = 256,
                                 compute_dtype=None):
    """Fused Pallas forward of DeterministicPolicy.net (3-layer MLP + tanh).

    block_b:             max batch-tile size (sweep 512/1024/2048 if desired).
    small_batch_fallback: batches <= this run the plain jnp MLP (kernel launch
                          + DMA latency dominate tiny act()-style calls).
    compute_dtype:       e.g. jnp.bfloat16 to halve HBM streaming bytes; MXU
                          accumulation stays f32.
    """
    w1, b1, w2, b2, w3, b3 = params

    squeeze_back = False
    if obs.ndim == 1:               # mirror `act()`'s reshape(1, -1) convenience
        obs = obs[None, :]
        squeeze_back = True

    B, S = obs.shape
    H = w1.shape[1]
    A = w3.shape[1]
    out_dtype = obs.dtype

    # Small-batch fallback: fixed kernel overhead >> work at these sizes.
    if B <= small_batch_fallback:
        out = _jnp_forward(obs, w1, b1, w2, b2, w3, b3).astype(out_dtype)
        return out[0] if squeeze_back else out

    # Optional bf16 streaming (biases / activations / tanh stay f32).
    if compute_dtype is not None:
        obs = obs.astype(compute_dtype)
        w1, w2, w3 = (w.astype(compute_dtype) for w in (w1, w2, w3))

    # Lane-dense 2-D f32 biases.
    b1 = b1.astype(jnp.float32).reshape(1, H)
    b2 = b2.astype(jnp.float32).reshape(1, H)
    b3 = b3.astype(jnp.float32).reshape(1, A)

    # Batch tile: big (HBM/overhead bound -> fewer, larger grid steps), but
    # clamped so the grid keeps >= 2 steps (v7x megacore) and is a multiple of
    # 8 sublanes. No wrapper-side padding: the partial last block is clipped
    # by Pallas on writeback.
    if B <= 16:
        tile_b = B                              # single block == full array dim
    else:
        tile_b = min(block_b, _round_up(pl.cdiv(B, 2), 8))
    grid = (pl.cdiv(B, tile_b),)

    const = lambda i: (0, 0)  # weights/biases: same resident block every step

    itemsize = jnp.dtype(obs.dtype).itemsize
    weight_bytes = sum(int(w.size) * jnp.dtype(w.dtype).itemsize
                       for w in (w1, w2, w3, b1, b2, b3))
    cost = pl.CostEstimate(
        flops=2 * B * (S * H + H * H + H * A),
        transcendentals=B * A,
        bytes_accessed=B * S * itemsize + B * A * jnp.dtype(out_dtype).itemsize
                       + weight_bytes,
    )

    out = pl.pallas_call(
        _policy_kernel,
        out_shape=jax.ShapeDtypeStruct((B, A), out_dtype),
        grid=grid,
        in_specs=[
            pl.BlockSpec((tile_b, S), lambda i: (i, 0)),   # obs tile
            pl.BlockSpec((S, H), const),                   # W1
            pl.BlockSpec((1, H), const),                   # b1
            pl.BlockSpec((H, H), const),                   # W2
            pl.BlockSpec((1, H), const),                   # b2
            pl.BlockSpec((H, A), const),                   # W3
            pl.BlockSpec((1, A), const),                   # b3
        ],
        out_specs=pl.BlockSpec((tile_b, A), lambda i: (i, 0)),
        compiler_params=pltpu.CompilerParams(
            dimension_semantics=("parallel",)),
        cost_estimate=cost,
    )(obs, w1, b1, w2, b2, w3, b3)

    if squeeze_back:
        out = out[0]
    return out


if __name__ == "__main__":
    key = jax.random.PRNGKey(0)
    # Small shapes consistent with the module (MuJoCo-ish dims).
    state_dim, hidden_dim, act_dim = 17, 32, 6
    max_action = 1.0  # NOTE: scaling/clamping by max_action happens in act(), not forward()

    ks = jax.random.split(key, 8)
    scale = 0.2
    w1 = scale * jax.random.normal(ks[0], (state_dim, hidden_dim), jnp.float32)
    b1 = scale * jax.random.normal(ks[1], (hidden_dim,), jnp.float32)
    w2 = scale * jax.random.normal(ks[2], (hidden_dim, hidden_dim), jnp.float32)
    b2 = scale * jax.random.normal(ks[3], (hidden_dim,), jnp.float32)
    w3 = scale * jax.random.normal(ks[4], (hidden_dim, act_dim), jnp.float32)
    b3 = scale * jax.random.normal(ks[5], (act_dim,), jnp.float32)
    params = (w1, b1, w2, b2, w3, b3)

    # --- Test 1: tiny batch (act()-style), Pallas path forced on -------------
    obs_small = jax.random.normal(ks[6], (2, state_dim), jnp.float32)
    y_small = deterministic_policy_forward(obs_small, params,
                                           small_batch_fallback=0)
    y_small = jax.block_until_ready(y_small)
    ref_small = _jnp_forward(obs_small, *params)
    assert y_small.shape == (2, act_dim), y_small.shape
    assert y_small.dtype == obs_small.dtype
    assert jnp.allclose(y_small, ref_small, atol=1e-4, rtol=1e-4), \
        float(jnp.max(jnp.abs(y_small - ref_small)))

    # --- Test 2: larger batch, non-divisible by the tile (partial last block,
    #             >= 2 grid steps so both v7x TensorCores get work) -----------
    batch = 300
    obs_big = jax.random.normal(ks[7], (batch, state_dim), jnp.float32)
    y_big = deterministic_policy_forward(obs_big, params)
    y_big = jax.block_until_ready(y_big)
    ref_big = _jnp_forward(obs_big, *params)
    assert y_big.shape == (batch, act_dim), y_big.shape
    assert y_big.dtype == obs_big.dtype
    assert jnp.allclose(y_big, ref_big, atol=1e-4, rtol=1e-4), \
        float(jnp.max(jnp.abs(y_big - ref_big)))

    # TODO(synk): act()'s clamp(out * max_action, -max, max) and the numpy
    # flatten() are trivial host-side post-processing, intentionally outside
    # the kernel.
    print("KERNEL_OK")
</pallas_src>

<mosaic_0001>
module attributes {stable_mosaic.version = 11 : i64} {
  func.func @_policy_kernel(%arg0: i32, %arg1: memref<2x17xf32, #tpu.memory_space<vmem>>, %arg2: memref<17x32xf32, #tpu.memory_space<vmem>>, %arg3: memref<1x32xf32, #tpu.memory_space<vmem>>, %arg4: memref<32x32xf32, #tpu.memory_space<vmem>>, %arg5: memref<1x32xf32, #tpu.memory_space<vmem>>, %arg6: memref<32x6xf32, #tpu.memory_space<vmem>>, %arg7: memref<1x6xf32, #tpu.memory_space<vmem>>, %arg8: memref<2x6xf32, #tpu.memory_space<vmem>>) attributes {dimension_semantics = [#tpu.dimension_semantics<parallel>], iteration_bounds = array<i64: 1>, scalar_prefetch = 0 : i64, scratch_operands = 0 : i64, tpu.core_type = #tpu.core_type<tc>, window_params = [{transform_indices = @transform_0, window_bounds = array<i64: 2, 17>}, {pipeline_mode = #tpu.pipeline_mode<synchronous>, transform_indices = @transform_1, window_bounds = array<i64: 17, 32>}, {pipeline_mode = #tpu.pipeline_mode<synchronous>, transform_indices = @transform_2, window_bounds = array<i64: 1, 32>}, {pipeline_mode = #tpu.pipeline_mode<synchronous>, transform_indices = @transform_3, window_bounds = array<i64: 32, 32>}, {pipeline_mode = #tpu.pipeline_mode<synchronous>, transform_indices = @transform_4, window_bounds = array<i64: 1, 32>}, {pipeline_mode = #tpu.pipeline_mode<synchronous>, transform_indices = @transform_5, window_bounds = array<i64: 32, 6>}, {pipeline_mode = #tpu.pipeline_mode<synchronous>, transform_indices = @transform_6, window_bounds = array<i64: 1, 6>}, {transform_indices = @transform_7, window_bounds = array<i64: 2, 6>}]} {
    %c0 = arith.constant 0 : index
    %c0_0 = arith.constant 0 : index
    %0 = vector.load %arg1[%c0, %c0_0] : memref<2x17xf32, #tpu.memory_space<vmem>>, vector<2x17xf32>
    %c0_1 = arith.constant 0 : index
    %c0_2 = arith.constant 0 : index
    %1 = vector.load %arg2[%c0_1, %c0_2] : memref<17x32xf32, #tpu.memory_space<vmem>>, vector<17x32xf32>
    %cst = arith.constant dense<0.000000e+00> : vector<2x32xf32>
    %2 = tpu.matmul %0, %1, %cst {dimension_numbers = #tpu.dot_dimension_numbers<[1], [0], [0], [1], [0, 0, 1, 1], [], []>} : vector<2x17xf32>, vector<17x32xf32>, vector<2x32xf32> -> vector<2x32xf32>
    %c0_3 = arith.constant 0 : index
    %c0_4 = arith.constant 0 : index
    %3 = vector.load %arg3[%c0_3, %c0_4] : memref<1x32xf32, #tpu.memory_space<vmem>>, vector<1x32xf32>
    %4 = vector.broadcast %3 : vector<1x32xf32> to vector<2x32xf32>
    %5 = arith.addf %2, %4 : vector<2x32xf32>
    %cst_5 = arith.constant 0.000000e+00 : f32
    %6 = vector.broadcast %cst_5 : f32 to vector<2x32xf32>
    %7 = arith.maximumf %5, %6 : vector<2x32xf32>
    %c0_6 = arith.constant 0 : index
    %c0_7 = arith.constant 0 : index
    %8 = vector.load %arg4[%c0_6, %c0_7] : memref<32x32xf32, #tpu.memory_space<vmem>>, vector<32x32xf32>
    %cst_8 = arith.constant dense<0.000000e+00> : vector<2x32xf32>
    %9 = tpu.matmul %7, %8, %cst_8 {dimension_numbers = #tpu.dot_dimension_numbers<[1], [0], [0], [1], [0, 0, 1, 1], [], []>} : vector<2x32xf32>, vector<32x32xf32>, vector<2x32xf32> -> vector<2x32xf32>
    %c0_9 = arith.constant 0 : index
    %c0_10 = arith.constant 0 : index
    %10 = vector.load %arg5[%c0_9, %c0_10] : memref<1x32xf32, #tpu.memory_space<vmem>>, vector<1x32xf32>
    %11 = vector.broadcast %10 : vector<1x32xf32> to vector<2x32xf32>
    %12 = arith.addf %9, %11 : vector<2x32xf32>
    %cst_11 = arith.constant 0.000000e+00 : f32
    %13 = vector.broadcast %cst_11 : f32 to vector<2x32xf32>
    %14 = arith.maximumf %12, %13 : vector<2x32xf32>
    %c0_12 = arith.constant 0 : index
    %c0_13 = arith.constant 0 : index
    %15 = vector.load %arg6[%c0_12, %c0_13] : memref<32x6xf32, #tpu.memory_space<vmem>>, vector<32x6xf32>
    %cst_14 = arith.constant dense<0.000000e+00> : vector<2x6xf32>
    %16 = tpu.matmul %14, %15, %cst_14 {dimension_numbers = #tpu.dot_dimension_numbers<[1], [0], [0], [1], [0, 0, 1, 1], [], []>} : vector<2x32xf32>, vector<32x6xf32>, vector<2x6xf32> -> vector<2x6xf32>
    %c0_15 = arith.constant 0 : index
    %c0_16 = arith.constant 0 : index
    %17 = vector.load %arg7[%c0_15, %c0_16] : memref<1x6xf32, #tpu.memory_space<vmem>>, vector<1x6xf32>
    %18 = vector.broadcast %17 : vector<1x6xf32> to vector<2x6xf32>
    %19 = arith.addf %16, %18 : vector<2x6xf32>
    %20 = math.tanh %19 : vector<2x6xf32>
    %c0_17 = arith.constant 0 : index
    %c0_18 = arith.constant 0 : index
    %21 = vector.load %arg8[%c0_17, %c0_18] : memref<2x6xf32, #tpu.memory_space<vmem>>, vector<2x6xf32>
    tpu.vector_store %arg8[%c0_17, %c0_18], %20 {strides = array<i32>} : memref<2x6xf32, #tpu.memory_space<vmem>>, vector<2x6xf32>,
    return
  }
  func.func @transform_0(%arg0: i32) -> (i32, i32) {
    %c0_i32 = arith.constant 0 : i32
    %c0_i32_0 = arith.constant 0 : i32
    return %arg0, %c0_i32 : i32, i32
  }
  func.func @transform_1(%arg0: i32) -> (i32, i32) {
    %c0_i32 = arith.constant 0 : i32
    %c0_i32_0 = arith.constant 0 : i32
    %c0_i32_1 = arith.constant 0 : i32
    return %c0_i32, %c0_i32_0 : i32, i32
  }
  func.func @transform_2(%arg0: i32) -> (i32, i32) {
    %c0_i32 = arith.constant 0 : i32
    %c0_i32_0 = arith.constant 0 : i32
    %c0_i32_1 = arith.constant 0 : i32
    return %c0_i32, %c0_i32_0 : i32, i32
  }
  func.func @transform_3(%arg0: i32) -> (i32, i32) {
    %c0_i32 = arith.constant 0 : i32
    %c0_i32_0 = arith.constant 0 : i32
    %c0_i32_1 = arith.constant 0 : i32
    return %c0_i32, %c0_i32_0 : i32, i32
  }
  func.func @transform_4(%arg0: i32) -> (i32, i32) {
    %c0_i32 = arith.constant 0 : i32
    %c0_i32_0 = arith.constant 0 : i32
    %c0_i32_1 = arith.constant 0 : i32
    return %c0_i32, %c0_i32_0 : i32, i32
  }
  func.func @transform_5(%arg0: i32) -> (i32, i32) {
    %c0_i32 = arith.constant 0 : i32
    %c0_i32_0 = arith.constant 0 : i32
    %c0_i32_1 = arith.constant 0 : i32
    return %c0_i32, %c0_i32_0 : i32, i32
  }
  func.func @transform_6(%arg0: i32) -> (i32, i32) {
    %c0_i32 = arith.constant 0 : i32
    %c0_i32_0 = arith.constant 0 : i32
    %c0_i32_1 = arith.constant 0 : i32
    return %c0_i32, %c0_i32_0 : i32, i32
  }
  func.func @transform_7(%arg0: i32) -> (i32, i32) {
    %c0_i32 = arith.constant 0 : i32
    %c0_i32_0 = arith.constant 0 : i32
    return %arg0, %c0_i32 : i32, i32
  }
}

</mosaic_0001>

<llo_original>
// kernel: tpu_custom_call.1
$region0: #{tpu_custom_call.1}
  #allocation0 [shape = 'u32[]', space=smem, size = 0x4, offset = 0x4, fixed_abs, tag = 'smem constant byte address 0x4 - core index']
  #allocation1 [shape = 'u32[144,128]{1,0:T(1,128)}', space=vmem, size = 0x12000, scoped, tag = 'internal scratch']
  %s0 = inlined_call_operand.vmem [shape: f32[2,17], index: 0, kind: input, shape index: {}]
  %s1 = inlined_call_operand.hbm [shape: f32[17,32], index: 1, kind: input, shape index: {}]
  %s2 = inlined_call_operand.vmem [shape: f32[1,32], index: 2, kind: input, shape index: {}]
  %s3 = inlined_call_operand.vmem [shape: f32[32,32], index: 3, kind: input, shape index: {}]
  %s4 = inlined_call_operand.vmem [shape: f32[1,32], index: 4, kind: input, shape index: {}]
  %s5 = inlined_call_operand.vmem [shape: f32[32,6], index: 5, kind: input, shape index: {}]
  %s6 = inlined_call_operand.vmem [shape: f32[1,6], index: 6, kind: input, shape index: {}]
  %s7 = inlined_call_operand.hbm [shape: f32[2,6], index: 7, kind: output, shape index: {}]
  %s8 = sld [smem:[#allocation0]]
  $region42: #{tpu_custom_call.1} parent=0
    _
  %s10 = ssub.s32 1, %s8
  %s11 = scalar_select 0, %s10, %s8
  $region1: #{tpu_custom_call.1} parent=0
    #allocation2 [shape = 'u8[12288]{0}', space=vmem, size = 0x3000, scoped, tag = 'input window, operand 1, single buffered']
    #allocation3 [shape = 's32[1]{0}', space=sflag, size = 0x4, scoped, tag = 'scoped memory for tpu_custom_call.1']
    #allocation4 [shape = 's32[1]{0}', space=sflag, size = 0x4, scoped, tag = 'scoped memory for tpu_custom_call.1']
    #allocation5 [shape = 'u8[1024]{0}', space=vmem, size = 0x400, scoped, tag = 'output window, operand 0, single buffered']
    %12 = vsyncpa [#allocation3], 0
    %13 = vsyncpa [#allocation4], 0
    // Predicated region
    $region2: #{tpu_custom_call.1} parent=1 // pred_check
      _
    $region3: #{tpu_custom_call.1} parent=1 // pred_check_branch
      %15 = sbr.rel (0) target = $region5
    $region4: #{tpu_custom_call.1} parent=1 // pred_region
      _
    $region5: #{tpu_custom_call.1} parent=1 // pred_fallthru
      _
    // Predicated region
    $region6: #{tpu_custom_call.1} parent=1 // pred_check
      _
    $region7: #{tpu_custom_call.1} parent=1 // pred_check_branch
      %17 = sbr.rel (0) target = $region9
    $region8: #{tpu_custom_call.1} parent=1 // pred_region
      %s19 = ssub.s32 384, 384
      %20 = vsyncadd [#allocation3], %s19
      %s21 = sshll.u32 [#allocation2], 4
      %s22 = int_to_ptr.vmem [resolvable:$true] %s21
      %27 = dma.hbm_to_vmem [thread:$0]  %s1, 384, %s22, [#allocation3], 128, 128, 8
    $region9: #{tpu_custom_call.1} parent=1 // pred_fallthru
      _
    // Predicated region
    $region10: #{tpu_custom_call.1} parent=1 // pred_check
      _
    $region11: #{tpu_custom_call.1} parent=1 // pred_check_branch
      %29 = sbr.rel (0) target = $region13
    $region12: #{tpu_custom_call.1} parent=1 // pred_region
      _
    $region13: #{tpu_custom_call.1} parent=1 // pred_fallthru
      _
    // Predicated region
    $region14: #{tpu_custom_call.1} parent=1 // pred_check
      _
    $region15: #{tpu_custom_call.1} parent=1 // pred_check_branch
      %31 = sbr.rel (0) target = $region17
    $region16: #{tpu_custom_call.1} parent=1 // pred_region
      _
    $region17: #{tpu_custom_call.1} parent=1 // pred_fallthru
      _
    // Predicated region
    $region18: #{tpu_custom_call.1} parent=1 // pred_check
      _
    $region19: #{tpu_custom_call.1} parent=1 // pred_check_branch
      %33 = sbr.rel (0) target = $region21
    $region20: #{tpu_custom_call.1} parent=1 // pred_region
      _
    $region21: #{tpu_custom_call.1} parent=1 // pred_fallthru
      _
    // Predicated region
    $region22: #{tpu_custom_call.1} parent=1 // pred_check
      _
    $region23: #{tpu_custom_call.1} parent=1 // pred_check_branch
      %35 = sbr.rel (0) target = $region25
    $region24: #{tpu_custom_call.1} parent=1 // pred_region
      _
    $region25: #{tpu_custom_call.1} parent=1 // pred_fallthru
      _
    // Predicated region
    $region26: #{tpu_custom_call.1} parent=1 // pred_check
      _
    $region27: #{tpu_custom_call.1} parent=1 // pred_check_branch
      %37 = sbr.rel (0) target = $region29
    $region28: #{tpu_custom_call.1} parent=1 // pred_region
      _
    $region29: #{tpu_custom_call.1} parent=1 // pred_fallthru
      _
    // Predicated region
    $region30: #{tpu_custom_call.1} parent=1 // pred_check
      _
    $region31: #{tpu_custom_call.1} parent=1 // pred_check_branch
      %39 = sbr.rel (0) target = $region33
    $region32: #{tpu_custom_call.1} parent=1 // pred_region
      %40 = dma.done [#allocation3], 384
    $region33: #{tpu_custom_call.1} parent=1 // pred_fallthru
      _
    %v41 = vld [vmem:[%s0] sm:$0x3]
    %v42 = vld [vmem:[#allocation2] sm:$0xff]
    %v43 = vld [vmem:[#allocation2 + $0x8] sm:$0xff]
    %v44 = vld [vmem:[#allocation2 + $0x10] sm:$0x1]
    %v45 = vld [vmem:[%s2] sm:$0x1]
    %v47 = vlaneseq
    %v48 = vshrl.u32 %v47, 7
    %v49 = vsub.s32 0, %v48
    %v50 = vrot.slane %v45, %v49
    %vm52 = vcmask 138240
    %v54 = vsel %vm52, %v41, 0
    %vm56 = vcmask 1040384
    %v58 = vsel %vm56, %v44, 0
    %60 = vmatprep.subr.mxu0 0.0
    %61 = vmatpush1.msra.mxu0 0.0
    %62 = vmatprep.subr.mxu0 0.0
    %63 = vmatpush1.msra.mxu0 0.0
    %64 = vmatprep.subr.mxu0 0.0
    %65 = vmatpush1.msra.mxu0 0.0
    %66 = vmatprep.subr.mxu0 0.0
    %67 = vmatpush1.msra.mxu0 0.0
    %68 = vmatprep.subr.mxu0 0.0
    %69 = vmatpush1.msra.mxu0 0.0
    %70 = vmatprep.subr.mxu0 0.0
    %71 = vmatpush1.msra.mxu0 0.0
    %72 = vmatprep.subr.mxu0 0.0
    %73 = vmatpush1.msra.mxu0 0.0
    %74 = vmatprep.subr.mxu0 0.0
    %75 = vmatpush1.msra.mxu0 0.0
    %76 = vmatprep.subr.mxu0 0.0
    %77 = vmatpush1.msra.mxu0 0.0
    %78 = vmatprep.subr.mxu0 0.0
    %79 = vmatpush1.msra.mxu0 0.0
    %80 = vmatprep.subr.mxu0 0.0
    %81 = vmatpush1.msra.mxu0 0.0
    %82 = vmatprep.subr.mxu0 0.0
    %83 = vmatpush1.msra.mxu0 0.0
    %84 = vmatprep.subr.mxu0 0.0
    %85 = vmatpush1.msra.mxu0 0.0
    %86 = vmatprep.subr.mxu0 0.0
    %87 = vmatpush1.msra.mxu0 %v58
    %88 = vmatprep.subr.mxu0 0.0
    %89 = vmatpush1.msra.mxu0 %v43
    %90 = vmatprep.subr.mxu0 0.0
    %91 = vmatpush1.msra.mxu0 %v42
    %92 = vmatprep.subr.mxu0 0.0
    %93 = vmatpush2.msra.mxu0 0.0
    %94 = vmatprep.subr.mxu0 0.0
    %95 = vmatpush2.msra.mxu0 0.0
    %96 = vmatprep.subr.mxu0 0.0
    %97 = vmatpush2.msra.mxu0 0.0
    %98 = vmatprep.subr.mxu0 0.0
    %99 = vmatpush2.msra.mxu0 0.0
    %100 = vmatprep.subr.mxu0 0.0
    %101 = vmatpush2.msra.mxu0 0.0
    %102 = vmatprep.subr.mxu0 0.0
    %103 = vmatpush2.msra.mxu0 0.0
    %104 = vmatprep.subr.mxu0 0.0
    %105 = vmatpush2.msra.mxu0 0.0
    %106 = vmatprep.subr.mxu0 0.0
    %107 = vmatpush2.msra.mxu0 0.0
    %108 = vmatprep.subr.mxu0 0.0
    %109 = vmatpush2.msra.mxu0 0.0
    %110 = vmatprep.subr.mxu0 0.0
    %111 = vmatpush2.msra.mxu0 0.0
    %112 = vmatprep.subr.mxu0 0.0
    %113 = vmatpush2.msra.mxu0 0.0
    %114 = vmatprep.subr.mxu0 0.0
    %115 = vmatpush2.msra.mxu0 0.0
    %116 = vmatprep.subr.mxu0 0.0
    %117 = vmatpush2.msra.mxu0 0.0
    %118 = vmatprep.subr.mxu0 0.0
    %119 = vmatpush2.msra.mxu0 0.0
    %120 = vmatprep.subr.mxu0 0.0
    %121 = vmatpush2.msra.mxu0 0.0
    %122 = vmatprep.subr.mxu0 0.0
    %123 = vmatpush2.msra.mxu0 0.0
    %124 = vmatprep.mubr.f32.mxu0 0.0
    %125 = vmatmul.mubr.f32.gmra.mxu0 %v54
    %v126 = vpop.f32.mrf.mxu0
    %v127 = vadd.f32 %v50, %v126
    %v128 = vpop.f32.mrf.mxu0
    %129 = vdwg.mxu0
    %v130 = vmax.f32 %v127, 0.0
    %v131 = vld [vmem:[%s3] sm:$0xff]
    %v132 = vld [vmem:[%s3 + $0x8] sm:$0xff]
    %v133 = vld [vmem:[%s3 + $0x10] sm:$0xff]
    %v134 = vld [vmem:[%s3 + $0x18] sm:$0xff]
    %v135 = vld [vmem:[%s4] sm:$0x1]
    %v137 = vlaneseq
    %v138 = vshrl.u32 %v137, 7
    %v139 = vsub.s32 0, %v138
    %v140 = vrot.slane %v135, %v139
    %vm142 = vcmask 261120
    %v144 = vsel %vm142, %v130, 0
    %146 = vmatprep.subr.mxu0 0.0
    %147 = vmatpush1.msra.mxu0 0.0
    %148 = vmatprep.subr.mxu0 0.0
    %149 = vmatpush1.msra.mxu0 0.0
    %150 = vmatprep.subr.mxu0 0.0
    %151 = vmatpush1.msra.mxu0 0.0
    %152 = vmatprep.subr.mxu0 0.0
    %153 = vmatpush1.msra.mxu0 0.0
    %154 = vmatprep.subr.mxu0 0.0
    %155 = vmatpush1.msra.mxu0 0.0
    %156 = vmatprep.subr.mxu0 0.0
    %157 = vmatpush1.msra.mxu0 0.0
    %158 = vmatprep.subr.mxu0 0.0
    %159 = vmatpush1.msra.mxu0 0.0
    %160 = vmatprep.subr.mxu0 0.0
    %161 = vmatpush1.msra.mxu0 0.0
    %162 = vmatprep.subr.mxu0 0.0
    %163 = vmatpush1.msra.mxu0 0.0
    %164 = vmatprep.subr.mxu0 0.0
    %165 = vmatpush1.msra.mxu0 0.0
    %166 = vmatprep.subr.mxu0 0.0
    %167 = vmatpush1.msra.mxu0 0.0
    %168 = vmatprep.subr.mxu0 0.0
    %169 = vmatpush1.msra.mxu0 0.0
    %170 = vmatprep.subr.mxu0 0.0
    %171 = vmatpush1.msra.mxu0 %v134
    %172 = vmatprep.subr.mxu0 0.0
    %173 = vmatpush1.msra.mxu0 %v133
    %174 = vmatprep.subr.mxu0 0.0
    %175 = vmatpush1.msra.mxu0 %v132
    %176 = vmatprep.subr.mxu0 0.0
    %177 = vmatpush1.msra.mxu0 %v131
    %178 = vmatprep.subr.mxu0 0.0
    %179 = vmatpush2.msra.mxu0 0.0
    %180 = vmatprep.subr.mxu0 0.0
    %181 = vmatpush2.msra.mxu0 0.0
    %182 = vmatprep.subr.mxu0 0.0
    %183 = vmatpush2.msra.mxu0 0.0
    %184 = vmatprep.subr.mxu0 0.0
    %185 = vmatpush2.msra.mxu0 0.0
    %186 = vmatprep.subr.mxu0 0.0
    %187 = vmatpush2.msra.mxu0 0.0
    %188 = vmatprep.subr.mxu0 0.0
    %189 = vmatpush2.msra.mxu0 0.0
    %190 = vmatprep.subr.mxu0 0.0
    %191 = vmatpush2.msra.mxu0 0.0
    %192 = vmatprep.subr.mxu0 0.0
    %193 = vmatpush2.msra.mxu0 0.0
    %194 = vmatprep.subr.mxu0 0.0
    %195 = vmatpush2.msra.mxu0 0.0
    %196 = vmatprep.subr.mxu0 0.0
    %197 = vmatpush2.msra.mxu0 0.0
    %198 = vmatprep.subr.mxu0 0.0
    %199 = vmatpush2.msra.mxu0 0.0
    %200 = vmatprep.subr.mxu0 0.0
    %201 = vmatpush2.msra.mxu0 0.0
    %202 = vmatprep.subr.mxu0 0.0
    %203 = vmatpush2.msra.mxu0 0.0
    %204 = vmatprep.subr.mxu0 0.0
    %205 = vmatpush2.msra.mxu0 0.0
    %206 = vmatprep.subr.mxu0 0.0
    %207 = vmatpush2.msra.mxu0 0.0
    %208 = vmatprep.subr.mxu0 0.0
    %209 = vmatpush2.msra.mxu0 0.0
    %210 = vmatprep.mubr.f32.mxu0 0.0
    %211 = vmatmul.mubr.f32.gmra.mxu0 %v144
    %v212 = vpop.f32.mrf.mxu0
    %v213 = vadd.f32 %v140, %v212
    %v214 = vpop.f32.mrf.mxu0
    %215 = vdwg.mxu0
    %v216 = vmax.f32 %v213, 0.0
    %v217 = vld [vmem:[%s5] sm:$0xff]
    %v218 = vld [vmem:[%s5 + $0x8] sm:$0xff]
    %v219 = vld [vmem:[%s5 + $0x10] sm:$0xff]
    %v220 = vld [vmem:[%s5 + $0x18] sm:$0xff]
    %v221 = vld [vmem:[%s6] sm:$0x1]
    %v223 = vlaneseq
    %v224 = vshrl.u32 %v223, 7
    %v225 = vsub.s32 0, %v224
    %v226 = vrot.slane %v221, %v225
    %v229 = vsel %vm142, %v216, 0
    %231 = vmatprep.subr.mxu0 0.0
    %232 = vmatpush1.msra.mxu0 0.0
    %233 = vmatprep.subr.mxu0 0.0
    %234 = vmatpush1.msra.mxu0 0.0
    %235 = vmatprep.subr.mxu0 0.0
    %236 = vmatpush1.msra.mxu0 0.0
    %237 = vmatprep.subr.mxu0 0.0
    %238 = vmatpush1.msra.mxu0 0.0
    %239 = vmatprep.subr.mxu0 0.0
    %240 = vmatpush1.msra.mxu0 0.0
    %241 = vmatprep.subr.mxu0 0.0
    %242 = vmatpush1.msra.mxu0 0.0
    %243 = vmatprep.subr.mxu0 0.0
    %244 = vmatpush1.msra.mxu0 0.0
    %245 = vmatprep.subr.mxu0 0.0
    %246 = vmatpush1.msra.mxu0 0.0
    %247 = vmatprep.subr.mxu0 0.0
    %248 = vmatpush1.msra.mxu0 0.0
    %249 = vmatprep.subr.mxu0 0.0
    %250 = vmatpush1.msra.mxu0 0.0
    %251 = vmatprep.subr.mxu0 0.0
    %252 = vmatpush1.msra.mxu0 0.0
    %253 = vmatprep.subr.mxu0 0.0
    %254 = vmatpush1.msra.mxu0 0.0
    %255 = vmatprep.subr.mxu0 0.0
    %256 = vmatpush1.msra.mxu0 %v220
    %257 = vmatprep.subr.mxu0 0.0
    %258 = vmatpush1.msra.mxu0 %v219
    %259 = vmatprep.subr.mxu0 0.0
    %260 = vmatpush1.msra.mxu0 %v218
    %261 = vmatprep.subr.mxu0 0.0
    %262 = vmatpush1.msra.mxu0 %v217
    %263 = vmatprep.subr.mxu0 0.0
    %264 = vmatpush2.msra.mxu0 0.0
    %265 = vmatprep.subr.mxu0 0.0
    %266 = vmatpush2.msra.mxu0 0.0
    %267 = vmatprep.subr.mxu0 0.0
    %268 = vmatpush2.msra.mxu0 0.0
    %269 = vmatprep.subr.mxu0 0.0
    %270 = vmatpush2.msra.mxu0 0.0
    %271 = vmatprep.subr.mxu0 0.0
    %272 = vmatpush2.msra.mxu0 0.0
    %273 = vmatprep.subr.mxu0 0.0
    %274 = vmatpush2.msra.mxu0 0.0
    %275 = vmatprep.subr.mxu0 0.0
    %276 = vmatpush2.msra.mxu0 0.0
    %277 = vmatprep.subr.mxu0 0.0
    %278 = vmatpush2.msra.mxu0 0.0
    %279 = vmatprep.subr.mxu0 0.0
    %280 = vmatpush2.msra.mxu0 0.0
    %281 = vmatprep.subr.mxu0 0.0
    %282 = vmatpush2.msra.mxu0 0.0
    %283 = vmatprep.subr.mxu0 0.0
    %284 = vmatpush2.msra.mxu0 0.0
    %285 = vmatprep.subr.mxu0 0.0
    %286 = vmatpush2.msra.mxu0 0.0
    %287 = vmatprep.subr.mxu0 0.0
    %288 = vmatpush2.msra.mxu0 0.0
    %289 = vmatprep.subr.mxu0 0.0
    %290 = vmatpush2.msra.mxu0 0.0
    %291 = vmatprep.subr.mxu0 0.0
    %292 = vmatpush2.msra.mxu0 0.0
    %293 = vmatprep.subr.mxu0 0.0
    %294 = vmatpush2.msra.mxu0 0.0
    %295 = vmatprep.mubr.f32.mxu0 0.0
    %296 = vmatmul.mubr.f32.gmra.mxu0 %v229
    %v297 = vpop.f32.mrf.mxu0
    %v298 = vadd.f32 %v226, %v297
    %v299 = vpop.f32.mrf.mxu0
    %300 = vdwg.mxu0
    %v301 = vtanh.pop %v298
    %vm302 = vcmask 41984
    %303 = vst.msk [vmem:[#allocation5] sm:$0x3] %vm302, %v301
    // Predicated region
    $region34: #{tpu_custom_call.1} parent=1 // pred_check
      _
    $region35: #{tpu_custom_call.1} parent=1 // pred_check_branch
      %305 = sbr.rel (0) target = $region37
    $region36: #{tpu_custom_call.1} parent=1 // pred_region
      %s307 = ssub.s32 32, 32
      %308 = vsyncadd [#allocation4], %s307
      %s310 = sshll.u32 [#allocation5], 4
      %s311 = int_to_ptr.vmem [resolvable:$true] %s310
      %313 = dma.vmem_to_hbm [thread:$0]  %s311, 32, %s7, [#allocation4]
    $region37: #{tpu_custom_call.1} parent=1 // pred_fallthru
      _
    // Predicated region
    $region38: #{tpu_custom_call.1} parent=1 // pred_check
      _
    $region39: #{tpu_custom_call.1} parent=1 // pred_check_branch
      %315 = sbr.rel (0) target = $region41
    $region40: #{tpu_custom_call.1} parent=1 // pred_region
      %316 = dma.done [#allocation4], 32
    $region41: #{tpu_custom_call.1} parent=1 // pred_fallthru
      _
    %317 = vsyncpa [#allocation3], 1
    %318 = vsyncpa [#allocation4], 1

</llo_original>
